<compile_context>
chip_gen: v7x
topology: tpu7x:2x2x1
jax: 0.10.0
libtpu: 0.0.40
codegen_flags: <defaults>
</compile_context>

<pallas_src>
import functools
import math

import jax
import jax.numpy as jnp
from jax.experimental import pallas as pl
from jax.experimental.pallas import tpu as pltpu

NEGATIVE_SLOPE = 0.2
SCALE = math.sqrt(2.0)

_FULL_LANE = 128


def _cdiv(a: int, b: int) -> int:
    return -(-a // b)


def _round_up(a: int, b: int) -> int:
    return _cdiv(a, b) * b


def _sublane_for(dtype) -> int:
    itemsize = jnp.dtype(dtype).itemsize
    if itemsize >= 4:
        return 8
    if itemsize == 2:
        return 16
    return 32


def _device_kind() -> str:
    try:
        return str(jax.devices()[0].device_kind).lower()
    except Exception:  # pragma: no cover - defensive
        return ""


def _num_tensorcores() -> int:
    """TensorCores per chip: 2 on v7x, 1 on v5e/v6e. Conservative fallback = 1."""
    try:
        dev = jax.devices()[0]
        nc = getattr(dev, "num_cores", None)
        if isinstance(nc, int) and nc > 0:
            return nc
        if "v7" in str(getattr(dev, "device_kind", "")).lower():
            return 2
    except Exception:  # pragma: no cover - defensive
        pass
    return 1


def _tile_budget() -> tuple[int, int | None]:
    """(target bytes per block, vmem_limit_bytes or None) per TPU generation."""
    kind = _device_kind()
    if "v6" in kind:
        # 4 MiB blocks -> ~16 MiB pipeline; raise scoped VMEM explicitly to cover it.
        return 4 << 20, 32 << 20
    # v5e (16 MiB scoped default) and v7x (64 MiB physical, both cores share): 2 MiB
    # blocks -> ~8 MiB pipeline per core, safely under every default.
    return 2 << 20, None


def _pick_lane(total: int) -> int | None:
    """Largest power-of-two lane width (<=128, >=8) dividing `total`, else None."""
    for lane in (128, 64, 32, 16, 8):
        if total % lane == 0:
            return lane
    return None


def _choose_row_tile(rows: int, lane: int, dtype, num_cores: int,
                     tile_bytes: int) -> int:
    sub = _sublane_for(dtype)
    itemsize = jnp.dtype(dtype).itemsize
    cap = max(sub, (tile_bytes // (lane * itemsize)) // sub * sub)

    if rows <= cap:
        if num_cores >= 2 and rows >= 2 * sub:
            # Single tile would fit: split ~2 ways so both v7x TensorCores get work.
            return min(cap, _round_up(_cdiv(rows, 2), sub))
        # Block dim == full array dim is always a legal tiling.
        return rows

    # Multi-tile: keep the block count a multiple of the core count so the
    # "parallel" grid axis splits evenly across v7x TensorCores (no-op on 1-core chips).
    nblocks = _cdiv(rows, cap)
    if num_cores >= 2 and nblocks % num_cores:
        nblocks = _round_up(nblocks, num_cores)
    return max(sub, min(cap, _round_up(_cdiv(rows, nblocks), sub)))


def _scaled_leaky_relu_kernel(x_ref, o_ref, *, negative_slope):
    x = x_ref[...]
    pos = jnp.asarray(SCALE, dtype=x.dtype)
    neg = jnp.asarray(SCALE * negative_slope, dtype=x.dtype)
    o_ref[...] = x * jnp.where(x >= 0, pos, neg)


def _elementwise_ref(x: jax.Array, negative_slope: float = NEGATIVE_SLOPE) -> jax.Array:
    pos = jnp.asarray(SCALE, dtype=x.dtype)
    neg = jnp.asarray(SCALE * negative_slope, dtype=x.dtype)
    return (x * jnp.where(x >= 0, pos, neg)).astype(x.dtype)


def _run_pallas_slab(slab: jax.Array, *, negative_slope: float,
                     donate_input: bool) -> jax.Array:
    rows, lane = slab.shape
    tile_bytes, vmem_limit = _tile_budget()
    row_tile = _choose_row_tile(rows, lane, slab.dtype, _num_tensorcores(), tile_bytes)
    grid = (pl.cdiv(rows, row_tile),)

    itemsize = jnp.dtype(slab.dtype).itemsize
    total = rows * lane

    extra = {}
    if donate_input:
        extra["input_output_aliases"] = {0: 0}

    return pl.pallas_call(
        functools.partial(_scaled_leaky_relu_kernel, negative_slope=negative_slope),
        out_shape=jax.ShapeDtypeStruct((rows, lane), slab.dtype),
        grid_spec=pltpu.PrefetchScalarGridSpec(
            num_scalar_prefetch=0,
            grid=grid,
            in_specs=[pl.BlockSpec((row_tile, lane), lambda i: (i, 0))],
            out_specs=pl.BlockSpec((row_tile, lane), lambda i: (i, 0)),
        ),
        compiler_params=pltpu.CompilerParams(
            dimension_semantics=("parallel",),
            vmem_limit_bytes=vmem_limit,
        ),
        cost_estimate=pl.CostEstimate(
            flops=2 * total,               # compare + multiply per element
            transcendentals=0,
            bytes_accessed=2 * total * itemsize,   # read + write, bandwidth-bound
        ),
        **extra,
    )(slab)


def scaled_leaky_relu(x: jax.Array, negative_slope: float = NEGATIVE_SLOPE,
                      *, donate_input: bool = False) -> jax.Array:
    """Elementwise leaky_relu(x, negative_slope) * sqrt(2). Floating dtypes only.

    donate_input=True aliases the output onto the input buffer (only use when the
    caller no longer needs x).
    """
    if not jnp.issubdtype(x.dtype, jnp.floating):
        raise TypeError(f"scaled_leaky_relu expects a floating dtype, got {x.dtype}")

    orig_shape = x.shape
    total = x.size
    if total == 0:
        return x

    lane = _pick_lane(total)
    if lane is None:
        # Size not divisible by 8: XLA's fused elementwise op is already at the HBM
        # roofline; avoids the 2-3x traffic of slicing/concatenating around a kernel.
        return _elementwise_ref(x, negative_slope)

    slab = x.reshape(total // lane, lane)   # row-major reshape: no HBM copy
    out = _run_pallas_slab(slab, negative_slope=negative_slope,
                           donate_input=donate_input)
    return out.reshape(orig_shape)


class ScaledLeakyReLU:
    """Drop-in functional equivalent of the PyTorch module's forward pass."""

    def __init__(self, negative_slope: float = NEGATIVE_SLOPE):
        self.negative_slope = negative_slope

    def __call__(self, x: jax.Array) -> jax.Array:
        return scaled_leaky_relu(x, self.negative_slope)


if __name__ == "__main__":
    key = jax.random.PRNGKey(0)

    # Main case: NCHW activation, lane-aligned total (2*4*16*16 = 2048 = 16 * 128).
    x = jax.random.normal(key, (2, 4, 16, 16), dtype=jnp.float32)
    mod = ScaledLeakyReLU(NEGATIVE_SLOPE)
    out = jax.block_until_ready(mod(x))

    ref = jnp.where(x >= 0, x, x * NEGATIVE_SLOPE) * SCALE   # torch op order
    assert out.shape == x.shape and out.dtype == x.dtype
    assert jnp.allclose(out, ref, atol=1e-6, rtol=1e-6), "mismatch vs reference (aligned)"

    # Ragged case A: total = 120 (divisible by 8, not 128) -> narrow-lane Pallas path.
    xa = jax.random.normal(jax.random.PRNGKey(1), (2, 3, 20), dtype=jnp.float32)
    outa = jax.block_until_ready(scaled_leaky_relu(xa))
    refa = jnp.where(xa >= 0, xa, xa * NEGATIVE_SLOPE) * SCALE
    assert jnp.allclose(outa, refa, atol=1e-6, rtol=1e-6), "mismatch vs reference (lane<128)"

    # Ragged case B: total = 105 (not divisible by 8) -> XLA fallback path.
    xb = jax.random.normal(jax.random.PRNGKey(2), (5, 7, 3), dtype=jnp.float32)
    outb = jax.block_until_ready(scaled_leaky_relu(xb))
    refb = jnp.where(xb >= 0, xb, xb * NEGATIVE_SLOPE) * SCALE
    assert jnp.allclose(outb, refb, atol=1e-6, rtol=1e-6), "mismatch vs reference (fallback)"

    print("KERNEL_OK")
</pallas_src>

<mosaic_0001>
module attributes {stable_mosaic.version = 11 : i64} {
  func.func @_scaled_leaky_relu_kernel(%arg0: i32, %arg1: memref<16x128xf32, #tpu.memory_space<vmem>>, %arg2: memref<16x128xf32, #tpu.memory_space<vmem>>) attributes {dimension_semantics = [#tpu.dimension_semantics<parallel>], iteration_bounds = array<i64: 1>, scalar_prefetch = 0 : i64, scratch_operands = 0 : i64, tpu.core_type = #tpu.core_type<tc>, window_params = [{transform_indices = @transform_0, window_bounds = array<i64: 16, 128>}, {transform_indices = @transform_1, window_bounds = array<i64: 16, 128>}]} {
    %c0 = arith.constant 0 : index
    %c0_0 = arith.constant 0 : index
    %0 = vector.load %arg1[%c0, %c0_0] : memref<16x128xf32, #tpu.memory_space<vmem>>, vector<16x128xf32>
    %cst = arith.constant 0.000000e+00 : f32
    %1 = vector.broadcast %cst : f32 to vector<16x128xf32>
    %2 = arith.cmpf oge, %0, %1 : vector<16x128xf32>
    %cst_1 = arith.constant 1.41421354 : f32
    %cst_2 = arith.constant 0.282842726 : f32
    %3 = vector.broadcast %cst_1 : f32 to vector<16x128xf32>
    %4 = vector.broadcast %cst_2 : f32 to vector<16x128xf32>
    %5 = arith.select %2, %3, %4 : vector<16x128xi1>, vector<16x128xf32>
    %6 = arith.mulf %0, %5 : vector<16x128xf32>
    %c0_3 = arith.constant 0 : index
    %c0_4 = arith.constant 0 : index
    %7 = vector.load %arg2[%c0_3, %c0_4] : memref<16x128xf32, #tpu.memory_space<vmem>>, vector<16x128xf32>
    tpu.vector_store %arg2[%c0_3, %c0_4], %6 {strides = array<i32>} : memref<16x128xf32, #tpu.memory_space<vmem>>, vector<16x128xf32>,
    return
  }
  func.func @transform_0(%arg0: i32) -> (i32, i32) {
    %c0_i32 = arith.constant 0 : i32
    %c0_i32_0 = arith.constant 0 : i32
    return %arg0, %c0_i32 : i32, i32
  }
  func.func @transform_1(%arg0: i32) -> (i32, i32) {
    %c0_i32 = arith.constant 0 : i32
    %c0_i32_0 = arith.constant 0 : i32
    return %arg0, %c0_i32 : i32, i32
  }
}

</mosaic_0001>

<llo_original>
// kernel: tpu_custom_call.1
$region0: #{tpu_custom_call.1}
  #allocation0 [shape = 'u32[]', space=smem, size = 0x4, offset = 0x4, fixed_abs, tag = 'smem constant byte address 0x4 - core index']
  #allocation1 [shape = 'u32[144,128]{1,0:T(1,128)}', space=vmem, size = 0x12000, scoped, tag = 'internal scratch']
  %s0 = inlined_call_operand.hbm [shape: f32[16,128], index: 0, kind: input, shape index: {}]
  %s1 = inlined_call_operand.hbm [shape: f32[16,128], index: 1, kind: output, shape index: {}]
  %s2 = sld [smem:[#allocation0]]
  $region18: #{tpu_custom_call.1} parent=0
    _
  %s4 = ssub.s32 1, %s2
  %s5 = scalar_select 0, %s4, %s2
  $region1: #{tpu_custom_call.1} parent=0
    #allocation2 [shape = 'u8[8192]{0}', space=vmem, size = 0x2000, scoped, tag = 'input window, operand 0, single buffered']
    #allocation3 [shape = 's32[1]{0}', space=sflag, size = 0x4, scoped, tag = 'scoped memory for tpu_custom_call.1']
    #allocation4 [shape = 's32[1]{0}', space=sflag, size = 0x4, scoped, tag = 'scoped memory for tpu_custom_call.1']
    #allocation5 [shape = 'u8[8192]{0}', space=vmem, size = 0x2000, scoped, tag = 'output window, operand 0, single buffered']
    %6 = vsyncpa [#allocation3], 0
    %7 = vsyncpa [#allocation4], 0
    // Predicated region
    $region2: #{tpu_custom_call.1} parent=1 // pred_check
      _
    $region3: #{tpu_custom_call.1} parent=1 // pred_check_branch
      %9 = sbr.rel (0) target = $region5
    $region4: #{tpu_custom_call.1} parent=1 // pred_region
      %s11 = ssub.s32 256, 256
      %12 = vsyncadd [#allocation3], %s11
      %s13 = sshll.u32 [#allocation2], 4
      %s14 = int_to_ptr.vmem [resolvable:$true] %s13
      %19 = dma.hbm_to_vmem [thread:$0]  %s0, 256, %s14, [#allocation3], 128, 128, 8
    $region5: #{tpu_custom_call.1} parent=1 // pred_fallthru
      _
    // Predicated region
    $region6: #{tpu_custom_call.1} parent=1 // pred_check
      _
    $region7: #{tpu_custom_call.1} parent=1 // pred_check_branch
      %21 = sbr.rel (0) target = $region9
    $region8: #{tpu_custom_call.1} parent=1 // pred_region
      %22 = dma.done [#allocation3], 256
    $region9: #{tpu_custom_call.1} parent=1 // pred_fallthru
      _
    %v23 = vld [vmem:[#allocation2] sm:$0xff]
    %v24 = vld [vmem:[#allocation2 + $0x8] sm:$0xff]
    %vm25 = vcmp.ge.f32.partialorder %v23, 0.0
    %vm26 = vcmp.ge.f32.partialorder %v24, 0.0
    %v27 = vsel %vm25, 1.4142135, 0.28284273
    %v28 = vsel %vm26, 1.4142135, 0.28284273
    %v29 = vmul.f32 %v23, %v27
    %v30 = vmul.f32 %v24, %v28
    %31 = vst [vmem:[#allocation5] sm:$0xff] %v29
    %32 = vst [vmem:[#allocation5 + $0x8] sm:$0xff] %v30
    // Predicated region
    $region10: #{tpu_custom_call.1} parent=1 // pred_check
      _
    $region11: #{tpu_custom_call.1} parent=1 // pred_check_branch
      %34 = sbr.rel (0) target = $region13
    $region12: #{tpu_custom_call.1} parent=1 // pred_region
      %s36 = ssub.s32 256, 256
      %37 = vsyncadd [#allocation4], %s36
      %s38 = sshll.u32 [#allocation5], 4
      %s39 = int_to_ptr.vmem [resolvable:$true] %s38
      %44 = dma.vmem_to_hbm [thread:$0]  %s39, 256, %s1, [#allocation4], 128, 128, 8
    $region13: #{tpu_custom_call.1} parent=1 // pred_fallthru
      _
    // Predicated region
    $region14: #{tpu_custom_call.1} parent=1 // pred_check
      _
    $region15: #{tpu_custom_call.1} parent=1 // pred_check_branch
      %46 = sbr.rel (0) target = $region17
    $region16: #{tpu_custom_call.1} parent=1 // pred_region
      %47 = dma.done [#allocation4], 256
    $region17: #{tpu_custom_call.1} parent=1 // pred_fallthru
      _
    %48 = vsyncpa [#allocation3], 1
    %49 = vsyncpa [#allocation4], 1

</llo_original>
